<compile_context>
chip_gen: v6e
topology: v6e:2x2x1
jax: 0.10.0
libtpu: 0.0.40
codegen_flags: <defaults>
</compile_context>

<pallas_src>
import functools

import jax
import jax.numpy as jnp
from jax.experimental import pallas as pl
from jax.experimental.pallas import tpu as pltpu


_LANE = 128
_MIB = 1024 * 1024
_COL_TILE_CANDIDATES = (32768, 16384, 8192, 4096, 2048, 1536, 1024, 768, 512,
                        384, 256, 128)


# --------------------------------------------------------------------------
# Hardware-aware configuration helpers (all trace-time Python).
# --------------------------------------------------------------------------
def _sublane_pack(dtype):
    """Sublane packing: 8 for 4-byte, 16 for 2-byte, 32 for 1-byte dtypes."""
    return max(8, 32 // jnp.dtype(dtype).itemsize)


@functools.lru_cache(maxsize=None)
def _device_kind():
    try:
        return jax.devices()[0].device_kind.lower()
    except Exception:
        return ""


@functools.lru_cache(maxsize=None)
def _is_v7x():
    kind = _device_kind()
    return ("v7" in kind) or ("7x" in kind)


@functools.lru_cache(maxsize=None)
def _vmem_budget():
    """Return (vmem_limit_bytes, tile_working_set_budget_bytes)."""
    cap = None
    try:
        cap = int(pltpu.get_tpu_info().vmem_capacity_bytes)
    except Exception:
        cap = None
    if cap is None:
        kind = _device_kind()
        if not kind or _is_v7x():
            cap = 64 * _MIB          # unknown or v7x: be conservative
        else:
            cap = 128 * _MIB         # v5e / v6e
    if cap <= 80 * _MIB:             # v7x class: 64 MiB physical per TC
        return 46 * _MIB, 36 * _MIB
    return 96 * _MIB, 56 * _MIB      # v5e / v6e: 128 MiB physical


def _dim_semantics(grid):
    """All axes parallel; on v7x, core-split the largest axis across 2 TCs."""
    sems = [pltpu.PARALLEL] * len(grid)
    if _is_v7x():
        ax = max(range(len(grid)), key=lambda a: grid[a])
        if grid[ax] >= 2:
            sems[ax] = pltpu.CORE_PARALLEL
    return tuple(sems)


# --------------------------------------------------------------------------
# Tile-size selection.
# --------------------------------------------------------------------------
def _pick_col_tile(inner1, inner2, pack, itemsize, budget):
    """Lane-aligned column tile dividing inner1, <= inner2, fitting budget."""
    # TODO(synk): tn is still capped by inner2; a skewed concat (wide x1,
    # narrow x2) could keep a wider x1 tile via a second chained pallas_call.
    cap = budget // max(6 * pack * itemsize, 1)
    for tn in (inner1,) + _COL_TILE_CANDIDATES:
        if tn % _LANE == 0 and inner1 % tn == 0 and tn <= inner2 and tn <= cap:
            return tn
    return None


def _pick_row_tile(outer, per_row_bytes, budget, pack):
    """Largest row tile (multiple of `pack`, or == outer) fitting `budget`."""
    if outer <= pack:
        return outer
    tm = budget // max(per_row_bytes, 1)
    if tm >= outer:
        return outer
    return max(pack, (tm // pack) * pack)


def _pick_dividing_row_tile(rows, cap_rows, pack):
    """Largest multiple of `pack` dividing `rows` and <= cap_rows (or None)."""
    if rows % pack != 0:
        return None
    cap_rows = max(cap_rows, pack)
    m = rows // pack
    best = pack
    d = 1
    while d * d <= m:
        if m % d == 0:
            for q in (d, m // d):
                t = q * pack
                if best < t <= cap_rows:
                    best = t
        d += 1
    return best


# --------------------------------------------------------------------------
# Kernels (pure tile copies).
# --------------------------------------------------------------------------
def _col_banded_kernel(c1, x1_ref, x2_ref, o_ref):
    """Each (row, col) grid step copies one full tile from exactly one input."""
    j = pl.program_id(1)

    @pl.when(j < c1)
    def _():
        o_ref[...] = x1_ref[...]

    @pl.when(j >= c1)
    def _():
        o_ref[...] = x2_ref[...]


def _row_banded_kernel(r1, x1_ref, x2_ref, o_ref):
    """Each (col, rowband) grid step copies one full tile from one input."""
    i = pl.program_id(1)

    @pl.when(i < r1)
    def _():
        o_ref[...] = x1_ref[...]

    @pl.when(i >= r1)
    def _():
        o_ref[...] = x2_ref[...]


def _two_band_kernel(split, x1_ref, x2_ref, o_ref):
    """Row-tile copy with a (possibly lane-unaligned) column split point."""
    o_ref[:, :split] = x1_ref[...]
    o_ref[:, split:] = x2_ref[...]


# --------------------------------------------------------------------------
# Pallas paths.
# --------------------------------------------------------------------------
def _concat_rows(a2d, b2d, vmem_limit, budget):
    """Row-band concat of 2-D views sharing the column count (outer == 1)."""
    R1, C = a2d.shape
    R2, _ = b2d.shape
    dtype = a2d.dtype
    itemsize = jnp.dtype(dtype).itemsize
    pack = _sublane_pack(dtype)

    if R1 % pack != 0:
        return None

    if C % _LANE == 0:
        tn = None
        cap = budget // max(6 * pack * itemsize, 1)
        for cand in (C,) + _COL_TILE_CANDIDATES:
            if cand % _LANE == 0 and C % cand == 0 and cand <= cap:
                tn = cand
                break
        if tn is None:
            return None
    else:
        tn = C                                  # full row: equals array dim
        if 6 * pack * tn * itemsize > budget:
            return None

    tm = _pick_dividing_row_tile(R1, budget // max(6 * tn * itemsize, 1), pack)
    if tm is None:
        return None

    r1 = R1 // tm
    r2 = pl.cdiv(R2, tm)
    ct = pl.cdiv(C, tn)
    # Column axis outermost, band axis innermost: the idle operand's clamped
    # block index is then constant across its unused stretch (no wasted DMA).
    grid = (ct, r1 + r2)

    return pl.pallas_call(
        functools.partial(_row_banded_kernel, r1),
        out_shape=jax.ShapeDtypeStruct((R1 + R2, C), dtype),
        grid=grid,
        in_specs=[
            pl.BlockSpec((tm, tn), lambda j, i: (jnp.minimum(i, r1 - 1), j)),
            pl.BlockSpec((tm, tn), lambda j, i: (jnp.maximum(i - r1, 0), j)),
        ],
        out_specs=pl.BlockSpec((tm, tn), lambda j, i: (i, j)),
        compiler_params=pltpu.CompilerParams(
            dimension_semantics=_dim_semantics(grid),
            vmem_limit_bytes=vmem_limit),
    )(a2d, b2d)


def _concat_cols_banded(x1_2d, x2_2d, vmem_limit, budget):
    """Lane-aligned split: banded, column-tiled copy."""
    outer, inner1 = x1_2d.shape
    _, inner2 = x2_2d.shape
    dtype = x1_2d.dtype
    itemsize = jnp.dtype(dtype).itemsize
    pack = _sublane_pack(dtype)

    tn = _pick_col_tile(inner1, inner2, pack, itemsize, budget)
    if tn is None:
        return None

    c1 = inner1 // tn
    c2 = pl.cdiv(inner2, tn)
    # Per-step working set (double-buffered): x1 tile + x2 tile + out tile.
    tm = _pick_row_tile(outer, 6 * tn * itemsize, budget, pack)
    grid = (pl.cdiv(outer, tm), c1 + c2)

    return pl.pallas_call(
        functools.partial(_col_banded_kernel, c1),
        out_shape=jax.ShapeDtypeStruct((outer, inner1 + inner2), dtype),
        grid=grid,
        in_specs=[
            # Clamp so the idle operand's block index is unchanged across
            # steps (Pallas skips the redundant re-fetch).
            pl.BlockSpec((tm, tn), lambda i, j: (i, jnp.minimum(j, c1 - 1))),
            pl.BlockSpec((tm, tn), lambda i, j: (i, jnp.maximum(j - c1, 0))),
        ],
        out_specs=pl.BlockSpec((tm, tn), lambda i, j: (i, j)),
        compiler_params=pltpu.CompilerParams(
            dimension_semantics=_dim_semantics(grid),
            vmem_limit_bytes=vmem_limit),
    )(x1_2d, x2_2d)


def _concat_cols_two_band(x1_2d, x2_2d, vmem_limit, budget):
    """Unaligned split: row-tiled two-band store (masked only at the split)."""
    outer, inner1 = x1_2d.shape
    _, inner2 = x2_2d.shape
    inner_out = inner1 + inner2
    dtype = x1_2d.dtype
    itemsize = jnp.dtype(dtype).itemsize
    pack = _sublane_pack(dtype)

    per_row = 2 * (inner1 + inner2 + inner_out) * itemsize  # double-buffered
    if per_row * min(outer, pack) > budget:
        # TODO(synk): huge lane-unaligned rows exceed the VMEM budget; a
        # column-tiled variant with a single masked straddle tile would fix it.
        return None
    tm = _pick_row_tile(outer, per_row, budget, pack)
    grid = (pl.cdiv(outer, tm),)

    return pl.pallas_call(
        functools.partial(_two_band_kernel, inner1),
        out_shape=jax.ShapeDtypeStruct((outer, inner_out), dtype),
        grid=grid,
        in_specs=[
            pl.BlockSpec((tm, inner1), lambda i: (i, 0)),
            pl.BlockSpec((tm, inner2), lambda i: (i, 0)),
        ],
        out_specs=pl.BlockSpec((tm, inner_out), lambda i: (i, 0)),
        compiler_params=pltpu.CompilerParams(
            dimension_semantics=_dim_semantics(grid),
            vmem_limit_bytes=vmem_limit),
    )(x1_2d, x2_2d)


# --------------------------------------------------------------------------
# Public entry point (== Concat.forward).
# --------------------------------------------------------------------------
@functools.partial(jax.jit, static_argnames=("dim",))
def concat(x1, x2, dim):
    """Pallas equivalent of torch.cat((x1, x2), dim=dim)."""
    if dim < 0:
        dim += x1.ndim
    assert 0 <= dim < x1.ndim
    assert x1.ndim == x2.ndim
    for ax in range(x1.ndim):
        if ax != dim:
            assert x1.shape[ax] == x2.shape[ax], "non-concat dims must match"
    assert x1.dtype == x2.dtype

    out_shape = list(x1.shape)
    out_shape[dim] = x1.shape[dim] + x2.shape[dim]
    out_shape = tuple(out_shape)

    if x1.size == 0 or x2.size == 0:
        # Degenerate zero-size concat: nothing for a kernel to do.
        return jnp.concatenate((x1, x2), axis=dim)

    vmem_limit, budget = _vmem_budget()

    outer = 1
    for ax in range(dim):
        outer *= x1.shape[ax]
    inner1 = x1.size // outer
    inner2 = x2.size // outer

    if outer == 1:
        # dim == 0 (or all leading dims are 1): concat along the sublane axis
        # of (rows_i, C) views instead of a single degenerate (1, N) row.
        C = inner1 // x1.shape[dim]
        if C >= 16:
            out2d = _concat_rows(x1.reshape(x1.shape[dim], C),
                                 x2.reshape(x2.shape[dim], C),
                                 vmem_limit, budget)
            if out2d is not None:
                return out2d.reshape(out_shape)

    x1_2d = x1.reshape(outer, inner1)
    x2_2d = x2.reshape(outer, inner2)

    out2d = None
    if inner1 % _LANE == 0:
        out2d = _concat_cols_banded(x1_2d, x2_2d, vmem_limit, budget)
    if out2d is None:
        out2d = _concat_cols_two_band(x1_2d, x2_2d, vmem_limit, budget)
    if out2d is None:
        # TODO(synk): pathological lane-unaligned shape whose single row band
        # exceeds the VMEM budget; fall back to XLA's concatenate.
        return jnp.concatenate((x1, x2), axis=dim)
    return out2d.reshape(out_shape)


if __name__ == "__main__":
    key = jax.random.PRNGKey(0)
    k1, k2, k3 = jax.random.split(key, 3)

    # `Concat` has no parameters; only the concat axis. Exercise the typical
    # multimodal-projector use (token/sequence concatenation) plus the other
    # code paths at small shapes.
    B, S, D = 2, 8, 32
    x1 = jax.random.normal(k1, (B, S, D), dtype=jnp.float32)
    x2 = jax.random.normal(k2, (B, S, D), dtype=jnp.float32)

    # dim=1: lane-aligned split (inner1 = S*D = 256) -> column-banded path.
    out = concat(x1, x2, dim=1)
    jax.block_until_ready(out)
    assert out.shape == (B, 2 * S, D)
    assert out.dtype == x1.dtype
    assert jnp.array_equal(out, jnp.concatenate((x1, x2), axis=1))

    # dim=-1: unaligned split (inner1 = 32) -> row-tiled two-band path.
    out2 = concat(x1, x2, dim=-1)
    jax.block_until_ready(out2)
    assert jnp.array_equal(out2, jnp.concatenate((x1, x2), axis=-1))

    # Unequal concat-dim sizes (inner2 = 128 < inner1 = 256), still aligned.
    x3 = jax.random.normal(k3, (B, 4, D), dtype=jnp.float32)
    out3 = concat(x1, x3, dim=1)
    jax.block_until_ready(out3)
    assert jnp.array_equal(out3, jnp.concatenate((x1, x3), axis=1))

    # dim=0 concat -> row-banded path (outer == 1 special case).
    a0 = jax.random.normal(k1, (16, S, D), dtype=jnp.float32)
    b0 = jax.random.normal(k2, (8, S, D), dtype=jnp.float32)
    out4 = concat(a0, b0, dim=0)
    jax.block_until_ready(out4)
    assert jnp.array_equal(out4, jnp.concatenate((a0, b0), axis=0))

    # bf16 (exercises the 16-row sublane packing), dim=1.
    x1b = x1.astype(jnp.bfloat16)
    x2b = x2.astype(jnp.bfloat16)
    out5 = concat(x1b, x2b, dim=1)
    jax.block_until_ready(out5)
    assert jnp.array_equal(out5, jnp.concatenate((x1b, x2b), axis=1))

    print("KERNEL_OK")
</pallas_src>

<mosaic_0001>
module attributes {stable_mosaic.version = 11 : i64} {
  func.func @_col_banded_kernel(%arg0: i32, %arg1: i32, %arg2: memref<2x256xf32, #tpu.memory_space<vmem>>, %arg3: memref<2x256xf32, #tpu.memory_space<vmem>>, %arg4: memref<2x256xf32, #tpu.memory_space<vmem>>) attributes {dimension_semantics = [#tpu.dimension_semantics<parallel>, #tpu.dimension_semantics<parallel>], iteration_bounds = array<i64: 1, 2>, scalar_prefetch = 0 : i64, scratch_operands = 0 : i64, tpu.core_type = #tpu.core_type<tc>, window_params = [{transform_indices = @transform_0, window_bounds = array<i64: 2, 256>}, {transform_indices = @transform_1, window_bounds = array<i64: 2, 256>}, {transform_indices = @transform_2, window_bounds = array<i64: 2, 256>}]} {
    %c1_i32 = arith.constant 1 : i32
    %0 = arith.cmpi slt, %arg1, %c1_i32 : i32
    %1 = arith.extui %0 : i1 to i32
    %c0_i32 = arith.constant 0 : i32
    %2 = arith.cmpi ne, %1, %c0_i32 : i32
    scf.if %2 {
      %c0 = arith.constant 0 : index
      %c0_2 = arith.constant 0 : index
      %6 = vector.load %arg2[%c0, %c0_2] : memref<2x256xf32, #tpu.memory_space<vmem>>, vector<2x256xf32>
      %c0_3 = arith.constant 0 : index
      %c0_4 = arith.constant 0 : index
      %7 = vector.load %arg4[%c0_3, %c0_4] : memref<2x256xf32, #tpu.memory_space<vmem>>, vector<2x256xf32>
      tpu.vector_store %arg4[%c0_3, %c0_4], %6 {strides = array<i32>} : memref<2x256xf32, #tpu.memory_space<vmem>>, vector<2x256xf32>,
    } else {
    }
    %c1_i32_0 = arith.constant 1 : i32
    %3 = arith.cmpi sge, %arg1, %c1_i32_0 : i32
    %4 = arith.extui %3 : i1 to i32
    %c0_i32_1 = arith.constant 0 : i32
    %5 = arith.cmpi ne, %4, %c0_i32_1 : i32
    scf.if %5 {
      %c0 = arith.constant 0 : index
      %c0_2 = arith.constant 0 : index
      %6 = vector.load %arg3[%c0, %c0_2] : memref<2x256xf32, #tpu.memory_space<vmem>>, vector<2x256xf32>
      %c0_3 = arith.constant 0 : index
      %c0_4 = arith.constant 0 : index
      %7 = vector.load %arg4[%c0_3, %c0_4] : memref<2x256xf32, #tpu.memory_space<vmem>>, vector<2x256xf32>
      tpu.vector_store %arg4[%c0_3, %c0_4], %6 {strides = array<i32>} : memref<2x256xf32, #tpu.memory_space<vmem>>, vector<2x256xf32>,
    } else {
    }
    return
  }
  func.func @transform_0(%arg0: i32, %arg1: i32) -> (i32, i32) {
    %c0_i32 = arith.constant 0 : i32
    %0 = arith.minsi %arg1, %c0_i32 : i32
    %c0_i32_0 = arith.constant 0 : i32
    return %arg0, %0 : i32, i32
  }
  func.func @transform_1(%arg0: i32, %arg1: i32) -> (i32, i32) {
    %c1_i32 = arith.constant 1 : i32
    %0 = arith.subi %arg1, %c1_i32 : i32
    %c0_i32 = arith.constant 0 : i32
    %1 = arith.maxsi %0, %c0_i32 : i32
    %c0_i32_0 = arith.constant 0 : i32
    return %arg0, %1 : i32, i32
  }
  func.func @transform_2(%arg0: i32, %arg1: i32) -> (i32, i32) {
    %c0_i32 = arith.constant 0 : i32
    return %arg0, %arg1 : i32, i32
  }
}

</mosaic_0001>

<llo_original>
// kernel: concat.1
$region0: #{concat.1}
  #allocation0 [shape = 'u32[]', space=smem, size = 0x4, offset = 0x4, fixed_abs, tag = 'smem constant byte address 0x4 - core index']
  #allocation1 [shape = 'u32[144,128]{1,0:T(1,128)}', space=vmem, size = 0x12000, scoped, tag = 'internal scratch']
  %s0 = inlined_call_operand.vmem [shape: f32[2,256], index: 0, kind: input, shape index: {}]
  %s1 = inlined_call_operand.vmem [shape: f32[2,256], index: 1, kind: input, shape index: {}]
  %s2 = inlined_call_operand.vmem [shape: f32[2,512], index: 2, kind: output, shape index: {}]
  %s3 = sld [smem:[#allocation0]]
  $region49: #{concat.1} parent=0
    _
  %s5 = ssub.s32 1, %s3
  %s6 = scalar_select 0, %s5, %s3
  loop: start=0, step=1, limit=4
  $region2: #{concat.1} parent=0 // loop_pre_header
    _
  $region3: #{concat.1} parent=0 // loop_header
    %s8 = sphi 0, %s12
    %p9 = scmp.ge.s32.totalorder %s8, 4
    %s15 = sphi 0, %s27
    %s16 = sphi 0, %s23
    %s17 = sphi 0, %s15
    %s18 = sphi 0, %s16
    %s19 = sphi 0, %s17
    %s20 = sphi 0, %s18
    %s36 = sphi 0, %s38
    %s39 = sphi 0, %s36
    %s40 = sphi 0, %s39
    %s56 = sphi 0, %s40
    %s70 = sphi 0, %s72
    %s73 = sphi 0, %s70
    %s74 = sphi 0, %s73
    %s90 = sphi 0, %s74
    %s98 = sphi 0, %s100
    %s101 = sphi 0, %s98
    %s102 = sphi 0, %s101
    %s118 = sphi 0, %s102
  $region4: #{concat.1} parent=0 // loop_header_branch
    %11 = sbr.rel (%p9) target = $region8
  $region5: #{concat.1} parent=0 // loop_body
    %s13 = ssub.s32 %s8, 1
    %s14 = ssub.s32 %s8, 2
    %s21 = sadd.s32 1, %s16
    %p22 = scmp.ge.s32.totalorder %s21, 2
    %s23 = scalar_select %p22, 0, %s21
    %s24 = sadd.s32 1, %s15
    %s25 = scalar_select %p22, %s24, %s15
    %p26 = scmp.ge.s32.totalorder %s25, 1
    %s27 = scalar_select %p26, 0, %s25
    %p28 = scmp.lt.s32.totalorder %s16, 0
    %s29 = scalar_select %p28, %s16, 0
    %p30 = scmp.lt.s32.totalorder %s23, 0
    %s31 = scalar_select %p30, %s23, 0
    %s32 = ssub.s32 %s15, %s27
    %s33 = ssub.s32 %s29, %s31
    %s34 = sor.u32 %s32, %s33
    %p35 = scmp.eq.s32.totalorder %s34, 0
    %s37 = sadd.s32 %s36, 1
    %s38 = scalar_select %p35, %s36, %s37
    %p41 = pneg %p35
    %p42 = scmp.eq.s32.totalorder %s8, 1
    %p43 = por %p41, %p42
    %p44 = scmp.ne.s32.totalorder %s36, %s39
    %p45 = scmp.eq.s32.totalorder %s8, 0
    %p46 = por %p44, %p45
    %p47 = scmp.ne.s32.totalorder %s36, %s39
    %p48 = scmp.eq.s32.totalorder %s13, 1
    %p49 = por %p47, %p48
    %p50 = scmp.ne.s32.totalorder %s39, %s40
    %p51 = scmp.eq.s32.totalorder %s13, 0
    %p52 = por %p50, %p51
    %p53 = scmp.ne.s32.totalorder %s39, %s40
    %p54 = scmp.eq.s32.totalorder %s14, 1
    %p55 = por %p53, %p54
    %p57 = scmp.ne.s32.totalorder %s40, %s56
    %p58 = scmp.eq.s32.totalorder %s14, 0
    %p59 = por %p57, %p58
    %s60 = ssub.s32 %s16, 1
    %p61 = scmp.gt.s32.totalorder %s60, 0
    %s62 = scalar_select %p61, %s60, 0
    %s63 = ssub.s32 %s23, 1
    %p64 = scmp.gt.s32.totalorder %s63, 0
    %s65 = scalar_select %p64, %s63, 0
    %s66 = ssub.s32 %s15, %s27
    %s67 = ssub.s32 %s62, %s65
    %s68 = sor.u32 %s66, %s67
    %p69 = scmp.eq.s32.totalorder %s68, 0
    %s71 = sadd.s32 %s70, 1
    %s72 = scalar_select %p69, %s70, %s71
    %p75 = pneg %p69
    %p76 = scmp.eq.s32.totalorder %s8, 1
    %p77 = por %p75, %p76
    %p78 = scmp.ne.s32.totalorder %s70, %s73
    %p79 = scmp.eq.s32.totalorder %s8, 0
    %p80 = por %p78, %p79
    %p81 = scmp.ne.s32.totalorder %s70, %s73
    %p82 = scmp.eq.s32.totalorder %s13, 1
    %p83 = por %p81, %p82
    %p84 = scmp.ne.s32.totalorder %s73, %s74
    %p85 = scmp.eq.s32.totalorder %s13, 0
    %p86 = por %p84, %p85
    %p87 = scmp.ne.s32.totalorder %s73, %s74
    %p88 = scmp.eq.s32.totalorder %s14, 1
    %p89 = por %p87, %p88
    %p91 = scmp.ne.s32.totalorder %s74, %s90
    %p92 = scmp.eq.s32.totalorder %s14, 0
    %p93 = por %p91, %p92
    %s94 = ssub.s32 %s15, %s27
    %s95 = ssub.s32 %s16, %s23
    %s96 = sor.u32 %s94, %s95
    %p97 = scmp.eq.s32.totalorder %s96, 0
    %s99 = sadd.s32 %s98, 1
    %s100 = scalar_select %p97, %s98, %s99
    %p103 = pneg %p97
    %p104 = scmp.eq.s32.totalorder %s8, 1
    %p105 = por %p103, %p104
    %p106 = scmp.ne.s32.totalorder %s98, %s101
    %p107 = scmp.eq.s32.totalorder %s8, 0
    %p108 = por %p106, %p107
    %p109 = scmp.ne.s32.totalorder %s98, %s101
    %p110 = scmp.eq.s32.totalorder %s13, 1
    %p111 = por %p109, %p110
    %p112 = scmp.ne.s32.totalorder %s101, %s102
    %p113 = scmp.eq.s32.totalorder %s13, 0
    %p114 = por %p112, %p113
    %p115 = scmp.ne.s32.totalorder %s101, %s102
    %p116 = scmp.eq.s32.totalorder %s14, 1
    %p117 = por %p115, %p116
    %p119 = scmp.ne.s32.totalorder %s102, %s118
    %p120 = scmp.eq.s32.totalorder %s14, 0
    %p121 = por %p119, %p120
    %p122 = scmp.le.s32.totalorder 1, %s8
    %p123 = scmp.lt.s32.totalorder %s8, 3
    %p124 = pnand %p122, %p123
    %p125 = pneg %p124
    // Predicated region
    $region9: #{concat.1} parent=5 // pred_check
      _
    $region10: #{concat.1} parent=5 // pred_check_branch
      %127 = sbr.rel (%p124) target = $region12
    $region11: #{concat.1} parent=5 // pred_region
      %s128 = ssub.s32 %s8, 1
    $region12: #{concat.1} parent=5 // pred_fallthru
      _
    %p129 = scmp.lt.s32.totalorder %s8, 2
    // Predicated region
    $region13: #{concat.1} parent=5 // pred_check
      %p130 = pneg %p129
    $region14: #{concat.1} parent=5 // pred_check_branch
      %132 = sbr.rel (%p130) target = $region16
    $region15: #{concat.1} parent=5 // pred_region
      // Predicated region
      $region17: #{concat.1} parent=15 // pred_check
        %p133 = pneg %p46
      $region18: #{concat.1} parent=15 // pred_check_branch
        %135 = sbr.rel (%p133) target = $region20
      $region19: #{concat.1} parent=15 // pred_region
        %p136 = scmp.lt.s32.totalorder %s16, 0
        %s137 = scalar_select %p136, %s16, 0
        %s138 = smul.u32 2, %s137
        %p139 = scmp.lt.s32.totalorder %s15, 0
        %s140 = scalar_select %p139, %s15, 0
        %p141 = scmp.lt.s32.totalorder %s138, 1
        %s142 = scalar_select %p141, %s138, 1
        %s143 = smul.addr %s140, 2
        %s144 = sadd.s32 %s142, %s143
        %s145 = smul.addr %s144, 2
        %s146 = scalar_lea.vmem %s0, %s145
        %p147 = scmp.lt.s32.totalorder %s16, 0
        %s148 = scalar_select %p147, %s16, 0
        %s149 = smul.u32 2, %s148
      $region20: #{concat.1} parent=15 // pred_fallthru
        _
      // Predicated region
      $region21: #{concat.1} parent=15 // pred_check
        %p150 = pneg %p80
      $region22: #{concat.1} parent=15 // pred_check_branch
        %152 = sbr.rel (%p150) target = $region24
      $region23: #{concat.1} parent=15 // pred_region
        %s153 = ssub.s32 %s16, 1
        %p154 = scmp.gt.s32.totalorder %s153, 0
        %s155 = scalar_select %p154, %s153, 0
        %s156 = smul.u32 2, %s155
        %p157 = scmp.lt.s32.totalorder %s15, 0
        %s158 = scalar_select %p157, %s15, 0
        %p159 = scmp.lt.s32.totalorder %s156, 1
        %s160 = scalar_select %p159, %s156, 1
        %s161 = smul.addr %s158, 2
        %s162 = sadd.s32 %s160, %s161
        %s163 = smul.addr %s162, 2
        %s164 = scalar_lea.vmem %s1, %s163
        %s165 = ssub.s32 %s16, 1
        %p166 = scmp.gt.s32.totalorder %s165, 0
        %s167 = scalar_select %p166, %s165, 0
        %s168 = smul.u32 2, %s167
      $region24: #{concat.1} parent=15 // pred_fallthru
        _
    $region16: #{concat.1} parent=5 // pred_fallthru
      _
    %p169 = scmp.le.s32.totalorder 1, %s8
    %p170 = scmp.lt.s32.totalorder %s8, 3
    %p171 = pnand %p169, %p170
    %p172 = pneg %p171
    // Predicated region
    $region25: #{concat.1} parent=5 // pred_check
      _
    $region26: #{concat.1} parent=5 // pred_check_branch
      %174 = sbr.rel (%p171) target = $region28
    $region27: #{concat.1} parent=5 // pred_region
      %s175 = ssub.s32 %s8, 1
      %p176 = scmp.lt.s32.totalorder %s18, 0
      %s177 = scalar_select %p176, %s18, 0
      %s178 = smul.u32 2, %s177
      %p179 = scmp.lt.s32.totalorder %s17, 0
      %s180 = scalar_select %p179, %s17, 0
      %p181 = scmp.lt.s32.totalorder %s178, 1
      %s182 = scalar_select %p181, %s178, 1
      %s183 = smul.addr %s180, 2
      %s184 = sadd.s32 %s182, %s183
      %s185 = smul.addr %s184, 2
      %s186 = scalar_lea.vmem %s0, %s185
      %p187 = pneg %p52
      %p188 = pneg %p49
      %s189 = ssub.s32 %s18, 1
      %p190 = scmp.gt.s32.totalorder %s189, 0
      %s191 = scalar_select %p190, %s189, 0
      %s192 = smul.u32 2, %s191
      %p193 = scmp.lt.s32.totalorder %s17, 0
      %s194 = scalar_select %p193, %s17, 0
      %p195 = scmp.lt.s32.totalorder %s192, 1
      %s196 = scalar_select %p195, %s192, 1
      %s197 = smul.addr %s194, 2
      %s198 = sadd.s32 %s196, %s197
      %s199 = smul.addr %s198, 2
      %s200 = scalar_lea.vmem %s1, %s199
      %p201 = pneg %p86
      %p202 = pneg %p83
      %p203 = pneg %p114
      %p204 = pneg %p111
      %s205 = smul.u32 2, %s18
      %p206 = scmp.lt.s32.totalorder %s17, 0
      %s207 = scalar_select %p206, %s17, 0
      %p208 = scmp.lt.s32.totalorder %s205, 3
      %s209 = scalar_select %p208, %s205, 3
      %s210 = smul.addr %s207, 4
      %s211 = sadd.s32 %s209, %s210
      %s212 = smul.addr %s211, 2
      %s213 = scalar_lea.vmem %s2, %s212
      %p214 = scmp.lt.s32.totalorder %s18, 0
      %s215 = scalar_select %p214, %s18, 0
      %s216 = smul.u32 2, %s215
      %p217 = scmp.lt.s32.totalorder %s17, 0
      %s218 = scalar_select %p217, %s17, 0
      %p219 = scmp.lt.s32.totalorder %s216, 1
      %s220 = scalar_select %p219, %s216, 1
      %s221 = smul.addr %s218, 2
      %s222 = sadd.s32 %s220, %s221
      %s223 = smul.addr %s222, 2
      %s224 = scalar_lea.vmem %s0, %s223
      %p225 = scmp.lt.s32.totalorder %s18, 0
      %s226 = scalar_select %p225, %s18, 0
      %s227 = smul.u32 2, %s226
      %s228 = ssub.s32 %s18, 1
      %p229 = scmp.gt.s32.totalorder %s228, 0
      %s230 = scalar_select %p229, %s228, 0
      %s231 = smul.u32 2, %s230
      %p232 = scmp.lt.s32.totalorder %s17, 0
      %s233 = scalar_select %p232, %s17, 0
      %p234 = scmp.lt.s32.totalorder %s231, 1
      %s235 = scalar_select %p234, %s231, 1
      %s236 = smul.addr %s233, 2
      %s237 = sadd.s32 %s235, %s236
      %s238 = smul.addr %s237, 2
      %s239 = scalar_lea.vmem %s1, %s238
      %s240 = ssub.s32 %s18, 1
      %p241 = scmp.gt.s32.totalorder %s240, 0
      %s242 = scalar_select %p241, %s240, 0
      %s243 = smul.u32 2, %s242
      %s244 = smul.u32 2, %s18
      %p245 = scmp.lt.s32.totalorder %s17, 0
      %s246 = scalar_select %p245, %s17, 0
      %p247 = scmp.lt.s32.totalorder %s244, 3
      %s248 = scalar_select %p247, %s244, 3
      %s249 = smul.addr %s246, 4
      %s250 = sadd.s32 %s248, %s249
      %s251 = smul.addr %s250, 2
      %s252 = scalar_lea.vmem %s2, %s251
      %s253 = smul.u32 2, %s18
      %p254 = scmp.lt.s32.totalorder %s18, 1
      // Predicated region
      $region29: #{concat.1} parent=27 // pred_check
        %p255 = pneg %p254
      $region30: #{concat.1} parent=27 // pred_check_branch
        %257 = sbr.rel (%p255) target = $region32
      $region31: #{concat.1} parent=27 // pred_region
        %v258 = vld [vmem:[%s224] sm:$0xf]
        %259 = vst [vmem:[%s252] sm:$0xf] %v258
      $region32: #{concat.1} parent=27 // pred_fallthru
        _
      %p260 = scmp.ge.s32.totalorder %s18, 1
      // Predicated region
      $region33: #{concat.1} parent=27 // pred_check
        %p261 = pneg %p260
      $region34: #{concat.1} parent=27 // pred_check_branch
        %263 = sbr.rel (%p261) target = $region36
      $region35: #{concat.1} parent=27 // pred_region
        %v264 = vld [vmem:[%s239] sm:$0xf]
        %265 = vst [vmem:[%s252] sm:$0xf] %v264
      $region36: #{concat.1} parent=27 // pred_fallthru
        _
      %s266 = smul.u32 2, %s18
      %p267 = scmp.lt.s32.totalorder %s17, 0
      %s268 = scalar_select %p267, %s17, 0
      %p269 = scmp.lt.s32.totalorder %s266, 3
      %s270 = scalar_select %p269, %s266, 3
      %s271 = smul.addr %s268, 4
      %s272 = sadd.s32 %s270, %s271
      %s273 = smul.addr %s272, 2
      %s274 = scalar_lea.vmem %s2, %s273
      // Predicated region
      $region37: #{concat.1} parent=27 // pred_check
        %p275 = pneg %p111
      $region38: #{concat.1} parent=27 // pred_check_branch
        %277 = sbr.rel (%p275) target = $region40
      $region39: #{concat.1} parent=27 // pred_region
        %s278 = smul.u32 2, %s18
      $region40: #{concat.1} parent=27 // pred_fallthru
        _
    $region28: #{concat.1} parent=5 // pred_fallthru
      _
    %p279 = scmp.le.s32.totalorder 2, %s8
    // Predicated region
    $region41: #{concat.1} parent=5 // pred_check
      %p280 = pneg %p279
    $region42: #{concat.1} parent=5 // pred_check_branch
      %282 = sbr.rel (%p280) target = $region44
    $region43: #{concat.1} parent=5 // pred_region
      %s283 = ssub.s32 %s8, 2
      // Predicated region
      $region45: #{concat.1} parent=43 // pred_check
        %p284 = pneg %p117
      $region46: #{concat.1} parent=43 // pred_check_branch
        %286 = sbr.rel (%p284) target = $region48
      $region47: #{concat.1} parent=43 // pred_region
        %s287 = smul.u32 2, %s20
        %p288 = scmp.lt.s32.totalorder %s19, 0
        %s289 = scalar_select %p288, %s19, 0
        %p290 = scmp.lt.s32.totalorder %s287, 3
        %s291 = scalar_select %p290, %s287, 3
        %s292 = smul.addr %s289, 4
        %s293 = sadd.s32 %s291, %s292
        %s294 = smul.addr %s293, 2
        %s295 = scalar_lea.vmem %s2, %s294
      $region48: #{concat.1} parent=43 // pred_fallthru
        _
    $region44: #{concat.1} parent=5 // pred_fallthru
      _
  $region6: #{concat.1} parent=0 // loop_footer
    %s12 = sadd.s32 1, %s8
  $region7: #{concat.1} parent=0 // loop_footer_branch
    %7 = sbr.rel target = $region3
  $region8: #{concat.1} parent=0 // loop_exit
    _

</llo_original>
